<compile_context>
chip_gen: v5e
topology: v5e:2x2
jax: 0.10.0
libtpu: 0.0.40
codegen_flags: <defaults>
</compile_context>

<pallas_src>
import functools

import jax
import jax.numpy as jnp
from jax import lax
from jax.experimental import pallas as pl
from jax.experimental.pallas import tpu as pltpu


def _gat_kernel(x_ref, w_ref, a_ref, o_ref, h_sc, s1_sc, s2_sc,
                *, tj, n_j, n_nodes, negative_slope, exp_bf16, has_tail):
    # x_ref: (1, N, Fin) bf16   w_ref: (Fin, Fp) bf16   a_ref: (2, Fp) f32
    # o_ref: (1, N, Fp) f32
    # h_sc:  (N, Fp) bf16       s1_sc: (N, 1) f32       s2_sc: (1, N) f32
    def leaky_relu(v):
        return jnp.where(v > 0, v, negative_slope * v)

    # ---- per-batch projection: h = x @ W (bf16 MXU operands, f32 accumulate) ----
    h = jnp.dot(x_ref[0], w_ref[...], preferred_element_type=jnp.float32)   # (N, Fp)

    # Attention projections as VPU lane-reductions (no h.T, no degenerate matmuls):
    # s1[i] = h[i]·a1 kept as a column; s2[j] = h[j]·a2 stored lane-major.
    s1_sc[...] = jnp.sum(h * a_ref[0:1, :], axis=1, keepdims=True)          # (N, 1)
    s2_col = jnp.sum(h * a_ref[1:2, :], axis=1, keepdims=True)              # (N, 1)
    s2_sc[...] = jnp.transpose(s2_col)                                      # (1, N)
    h_sc[...] = h.astype(jnp.bfloat16)

    # h_prime accumulates directly into the resident f32 output block.
    o_ref[...] = jnp.zeros_like(o_ref)

    # ---- column-tiled attention: softmax over i is independent per column j ----
    @pl.loop(0, n_j)
    def _(step):
        j0_raw = step * tj
        if has_tail:
            # Clamp the last block into range; re-visited rows are masked below.
            j0 = jnp.minimum(j0_raw, n_nodes - tj)
        elif tj % 128 == 0:
            j0 = pl.multiple_of(j0_raw, 128)
        else:
            j0 = j0_raw

        e = leaky_relu(s1_sc[...] + s2_sc[:, pl.ds(j0, tj)])                # (N, tj)
        m = jnp.max(e, axis=0, keepdims=True)                               # (1, tj)
        z = e - m
        if exp_bf16:
            z = z.astype(jnp.bfloat16)          # bf16 EUP path (v6e / v7x)
        p = jnp.exp(z)                                                      # (N, tj)
        l = jnp.sum(p, axis=0, keepdims=True, dtype=jnp.float32)            # (1, tj)
        # Normalize the value rows instead of the (N, tj) probability block:
        #   h'[i] = sum_j p[i, j] * (h[j] / l[j])
        r_col = jnp.transpose(pl.reciprocal(l, approx=True))                # (tj, 1)

        h_blk = h_sc[pl.ds(j0, tj), :]                                      # (tj, Fp)
        if has_tail:
            # Rows whose global index falls below j0_raw were handled by the
            # previous block; zero them so the overlapped tail contributes 0.
            row = j0 + lax.broadcasted_iota(jnp.int32, (tj, 1), 0)
            h_blk = jnp.where(row >= j0_raw, h_blk, jnp.zeros_like(h_blk))
        h_blk = h_blk * r_col.astype(jnp.bfloat16)

        o_ref[0] += jnp.dot(p.astype(jnp.bfloat16), h_blk,
                            preferred_element_type=jnp.float32)

    o_ref[0] = leaky_relu(o_ref[0])


def _tpu_caps():
    """Best-effort (vmem_capacity_bytes, has_bf16_eup); safe fallbacks."""
    vmem_cap = None
    try:
        vmem_cap = getattr(pltpu.get_tpu_info(), "vmem_capacity_bytes", None)
    except Exception:
        vmem_cap = None
    kind = ""
    try:
        kind = jax.devices()[0].device_kind.lower()
    except Exception:
        pass
    if not vmem_cap:
        # v7x has 64 MiB per TensorCore; v5e/v6e have 128 MiB.
        vmem_cap = (64 if ("v7" in kind or "7x" in kind) else 128) * 1024 * 1024
    # bf16 EUP/VPU exist on v6e/v7x; v5e and older keep the f32 exp path.
    bf16_eup = ("v6" in kind) or ("v7" in kind) or ("7x" in kind)
    return int(vmem_cap), bf16_eup


def _vmem_limit_bytes(vmem_cap):
    # ~3/4 of physical VMEM: ~96 MiB on 128-MiB v5e/v6e (well above the default
    # scoped limit), 48 MiB on 64-MiB v7x.
    return int(min(100 * 1024 * 1024, (vmem_cap * 3) // 4))


def _choose_tj(n, fin, f_pad, vmem_limit):
    """Column-tile width.  Per-step f32 temporaries are ~3*N*tj*4 B; resident
    state is h(bf16) + s1 + x/out double buffers.  Keep the set inside budget."""
    tj_cap = 512 if vmem_limit > (64 << 20) else 256     # smaller tiles on v7x
    fixed = (n * f_pad * 2            # h_bf16 scratch
             + n * 128 * 4            # s1 column (lane-padded)
             + 2 * n * fin * 2        # x block, double-buffered bf16
             + 2 * n * f_pad * 4)     # out block, double-buffered f32
    budget = vmem_limit - fixed - (4 << 20)              # slack
    if budget > 0:
        tj_cap = min(tj_cap, max(128, (budget // (12 * n) // 128) * 128))
    else:
        tj_cap = 128
    if n <= tj_cap:
        return n                      # single column block, no in-kernel tail
    for align in (256, 128):          # prefer MXU-friendly divisors of N
        cand = (tj_cap // align) * align
        while cand >= align:
            if n % cand == 0:
                return cand
            cand -= align
    return tj_cap                     # masked/clamped tail block handles the rest


def gat_block(x, W, a, negative_slope=0.2):
    batch, N, in_features = x.shape
    out_features = W.shape[1]

    # Lane-dense output: pad the feature (lane) dim to a multiple of 128; zero
    # columns are exact and sliced off after the call.
    f_pad = ((out_features + 127) // 128) * 128
    a_rows = a.reshape(2, out_features)
    if f_pad != out_features:
        W = jnp.pad(W, ((0, 0), (0, f_pad - out_features)))
        a_rows = jnp.pad(a_rows, ((0, 0), (0, f_pad - out_features)))

    # bf16 MXU operands prepared in the wrapper (halves x/W DMA + VMEM blocks).
    x_bf = x.astype(jnp.bfloat16)
    w_bf = W.astype(jnp.bfloat16)
    a_rows = a_rows.astype(jnp.float32)

    vmem_cap, bf16_eup = _tpu_caps()
    vmem_limit = _vmem_limit_bytes(vmem_cap)
    tj = _choose_tj(N, in_features, f_pad, vmem_limit)
    n_j = pl.cdiv(N, tj)
    has_tail = (N % tj) != 0

    kernel = functools.partial(
        _gat_kernel, tj=tj, n_j=n_j, n_nodes=N,
        negative_slope=negative_slope, exp_bf16=bf16_eup, has_tail=has_tail)

    out = pl.pallas_call(
        kernel,
        out_shape=jax.ShapeDtypeStruct((batch, N, f_pad), jnp.float32),
        grid_spec=pltpu.PrefetchScalarGridSpec(
            num_scalar_prefetch=0,
            grid=(batch,),
            in_specs=[
                pl.BlockSpec((1, N, in_features), lambda b: (b, 0, 0)),
                pl.BlockSpec((in_features, f_pad), lambda b: (0, 0)),
                pl.BlockSpec((2, f_pad), lambda b: (0, 0)),
            ],
            out_specs=pl.BlockSpec((1, N, f_pad), lambda b: (b, 0, 0)),
            scratch_shapes=[
                pltpu.VMEM((N, f_pad), jnp.bfloat16),   # h (value rows, MXU operand)
                pltpu.VMEM((N, 1), jnp.float32),        # s1 = h · a1
                pltpu.VMEM((1, N), jnp.float32),        # s2 = h · a2 (lane-major)
            ],
        ),
        compiler_params=pltpu.CompilerParams(
            dimension_semantics=("parallel",),
            vmem_limit_bytes=vmem_limit,
        ),
    )(x_bf, w_bf, a_rows)

    if f_pad != out_features:
        out = out[..., :out_features]
    if out.dtype != x.dtype:
        out = out.astype(x.dtype)
    return out


def _reference(x, W, a, negative_slope):
    # Pure-JAX f32 reference mirroring the PyTorch forward (dropout = identity).
    out_features = W.shape[1]
    h = jnp.einsum("bnf,fo->bno", x, W)
    a1 = a[:out_features, 0]
    a2 = a[out_features:, 0]
    s1 = jnp.einsum("bno,o->bn", h, a1)     # contribution of node i
    s2 = jnp.einsum("bno,o->bn", h, a2)     # contribution of node j
    e = s1[:, :, None] + s2[:, None, :]     # (B, N, N), e[b, i, j]
    e = jnp.where(e > 0, e, negative_slope * e)
    att = jax.nn.softmax(e, axis=1)         # softmax over i (dim=1)
    hp = jnp.einsum("bij,bjo->bio", att, h)
    return jnp.where(hp > 0, hp, negative_slope * hp)


def _xavier_uniform(key, shape, gain):
    fan_in, fan_out = shape[0], shape[1]
    limit = gain * jnp.sqrt(6.0 / (fan_in + fan_out))
    return jax.random.uniform(key, shape, jnp.float32, -limit, limit)


if __name__ == "__main__":
    batch, N = 2, 16
    in_features, out_features = 32, 32
    negative_slope = 0.2

    key = jax.random.PRNGKey(0)
    kx, kw, ka = jax.random.split(key, 3)

    x = jax.random.normal(kx, (batch, N, in_features), jnp.float32)
    W = _xavier_uniform(kw, (in_features, out_features), gain=1.414)
    a = _xavier_uniform(ka, (2 * out_features, 1), gain=1.414)

    out = gat_block(x, W, a, negative_slope=negative_slope)
    out = jax.block_until_ready(out)

    ref = _reference(x, W, a, negative_slope)
    assert out.shape == (batch, N, out_features)
    # bf16 MXU operands, bf16 exp (on v6e/v7x), bf16-normalized values and the
    # approx reciprocal => loose tolerance vs the f32 reference.
    assert jnp.allclose(out, ref, atol=7.5e-2, rtol=7.5e-2), (
        "mismatch vs reference: max abs err "
        f"{float(jnp.max(jnp.abs(out - ref)))}")

    print("KERNEL_OK")
</pallas_src>

<mosaic_0001>
module attributes {stable_mosaic.version = 11 : i64} {
  func.func @_gat_kernel(%arg0: i32, %arg1: memref<1x16x32xbf16, #tpu.memory_space<vmem>>, %arg2: memref<32x128xbf16, #tpu.memory_space<vmem>>, %arg3: memref<2x128xf32, #tpu.memory_space<vmem>>, %arg4: memref<1x16x128xf32, #tpu.memory_space<vmem>>, %arg5: memref<16x128xbf16, #tpu.memory_space<vmem>>, %arg6: memref<16x1xf32, #tpu.memory_space<vmem>>, %arg7: memref<1x16xf32, #tpu.memory_space<vmem>>) attributes {dimension_semantics = [#tpu.dimension_semantics<parallel>], iteration_bounds = array<i64: 2>, scalar_prefetch = 0 : i64, scratch_operands = 3 : i64, tpu.core_type = #tpu.core_type<tc>, window_params = [{transform_indices = @transform_0, window_bounds = array<i64: 1, 16, 32>}, {pipeline_mode = #tpu.pipeline_mode<synchronous>, transform_indices = @transform_1, window_bounds = array<i64: 32, 128>}, {pipeline_mode = #tpu.pipeline_mode<synchronous>, transform_indices = @transform_2, window_bounds = array<i64: 2, 128>}, {transform_indices = @transform_3, window_bounds = array<i64: 1, 16, 128>}]} {
    %c0 = arith.constant 0 : index
    %c0_0 = arith.constant 0 : index
    %c0_1 = arith.constant 0 : index
    %0 = vector.load %arg1[%c0, %c0_0, %c0_1] : memref<1x16x32xbf16, #tpu.memory_space<vmem>>, vector<1x16x32xbf16>
    %1 = vector.shape_cast %0 : vector<1x16x32xbf16> to vector<16x32xbf16>
    %c0_2 = arith.constant 0 : index
    %c0_3 = arith.constant 0 : index
    %2 = vector.load %arg2[%c0_2, %c0_3] : memref<32x128xbf16, #tpu.memory_space<vmem>>, vector<32x128xbf16>
    %cst = arith.constant dense<0.000000e+00> : vector<16x128xf32>
    %3 = tpu.matmul %1, %2, %cst {dimension_numbers = #tpu.dot_dimension_numbers<[1], [0], [0], [1], [0, 0, 1, 1], [], []>} : vector<16x32xbf16>, vector<32x128xbf16>, vector<16x128xf32> -> vector<16x128xf32>
    %c0_4 = arith.constant 0 : index
    %c0_5 = arith.constant 0 : index
    %4 = vector.load %arg3[%c0_4, %c0_5] : memref<2x128xf32, #tpu.memory_space<vmem>>, vector<1x128xf32>
    %5 = vector.broadcast %4 : vector<1x128xf32> to vector<16x128xf32>
    %6 = arith.mulf %3, %5 : vector<16x128xf32>
    %cst_6 = arith.constant dense<0.000000e+00> : vector<16xf32>
    %7 = vector.multi_reduction <add>, %6, %cst_6 [1] : vector<16x128xf32> to vector<16xf32>
    %8 = vector.shape_cast %7 : vector<16xf32> to vector<16x1xf32>
    %c0_7 = arith.constant 0 : index
    %c0_8 = arith.constant 0 : index
    %9 = vector.load %arg6[%c0_7, %c0_8] : memref<16x1xf32, #tpu.memory_space<vmem>>, vector<16x1xf32>
    tpu.vector_store %arg6[%c0_7, %c0_8], %8 {strides = array<i32>} : memref<16x1xf32, #tpu.memory_space<vmem>>, vector<16x1xf32>,
    %c1 = arith.constant 1 : index
    %c0_9 = arith.constant 0 : index
    %10 = vector.load %arg3[%c1, %c0_9] : memref<2x128xf32, #tpu.memory_space<vmem>>, vector<1x128xf32>
    %11 = vector.broadcast %10 : vector<1x128xf32> to vector<16x128xf32>
    %12 = arith.mulf %3, %11 : vector<16x128xf32>
    %cst_10 = arith.constant dense<0.000000e+00> : vector<16xf32>
    %13 = vector.multi_reduction <add>, %12, %cst_10 [1] : vector<16x128xf32> to vector<16xf32>
    %14 = vector.shape_cast %13 : vector<16xf32> to vector<16x1xf32>
    %15 = tpu.transpose %14, [1, 0] : vector<16x1xf32> -> vector<1x16xf32>
    %c0_11 = arith.constant 0 : index
    %c0_12 = arith.constant 0 : index
    %16 = vector.load %arg7[%c0_11, %c0_12] : memref<1x16xf32, #tpu.memory_space<vmem>>, vector<1x16xf32>
    tpu.vector_store %arg7[%c0_11, %c0_12], %15 {strides = array<i32>} : memref<1x16xf32, #tpu.memory_space<vmem>>, vector<1x16xf32>,
    %17 = arith.truncf %3 : vector<16x128xf32> to vector<16x128xbf16>
    %c0_13 = arith.constant 0 : index
    %c0_14 = arith.constant 0 : index
    %18 = vector.load %arg5[%c0_13, %c0_14] : memref<16x128xbf16, #tpu.memory_space<vmem>>, vector<16x128xbf16>
    tpu.vector_store %arg5[%c0_13, %c0_14], %17 {strides = array<i32>} : memref<16x128xbf16, #tpu.memory_space<vmem>>, vector<16x128xbf16>,
    %cst_15 = arith.constant 0.000000e+00 : f32
    %19 = vector.broadcast %cst_15 : f32 to vector<1x16x128xf32>
    %c0_16 = arith.constant 0 : index
    %c0_17 = arith.constant 0 : index
    %c0_18 = arith.constant 0 : index
    %20 = vector.load %arg4[%c0_16, %c0_17, %c0_18] : memref<1x16x128xf32, #tpu.memory_space<vmem>>, vector<1x16x128xf32>
    tpu.vector_store %arg4[%c0_16, %c0_17, %c0_18], %19 {strides = array<i32>} : memref<1x16x128xf32, #tpu.memory_space<vmem>>, vector<1x16x128xf32>,
    %c0_i32 = arith.constant 0 : i32
    %c1_i32 = arith.constant 1 : i32
    %21 = arith.muli %c0_i32, %c1_i32 : i32
    %c0_i32_19 = arith.constant 0 : i32
    %22 = arith.addi %c0_i32_19, %21 : i32
    %c16_i32 = arith.constant 16 : i32
    %23 = arith.muli %22, %c16_i32 : i32
    %c0_20 = arith.constant 0 : index
    %c0_21 = arith.constant 0 : index
    %24 = vector.load %arg6[%c0_20, %c0_21] : memref<16x1xf32, #tpu.memory_space<vmem>>, vector<16x1xf32>
    %c0_22 = arith.constant 0 : index
    %25 = arith.index_cast %23 : i32 to index
    %26 = vector.load %arg7[%c0_22, %25] : memref<1x16xf32, #tpu.memory_space<vmem>>, vector<1x16xf32>
    %27 = vector.broadcast %24 : vector<16x1xf32> to vector<16x16xf32>
    %28 = vector.broadcast %26 : vector<1x16xf32> to vector<16x16xf32>
    %29 = arith.addf %27, %28 : vector<16x16xf32>
    %cst_23 = arith.constant 0.000000e+00 : f32
    %30 = vector.broadcast %cst_23 : f32 to vector<16x16xf32>
    %31 = arith.cmpf ogt, %29, %30 : vector<16x16xf32>
    %cst_24 = arith.constant 2.000000e-01 : f32
    %32 = vector.broadcast %cst_24 : f32 to vector<16x16xf32>
    %33 = arith.mulf %32, %29 : vector<16x16xf32>
    %34 = arith.select %31, %29, %33 : vector<16x16xi1>, vector<16x16xf32>
    %cst_25 = arith.constant dense<0xFF800000> : vector<16xf32>
    %35 = vector.multi_reduction <maximumf>, %34, %cst_25 [0] : vector<16x16xf32> to vector<16xf32>
    %36 = vector.shape_cast %35 : vector<16xf32> to vector<1x16xf32>
    %37 = vector.broadcast %36 : vector<1x16xf32> to vector<16x16xf32>
    %38 = arith.subf %34, %37 : vector<16x16xf32>
    %39 = math.exp %38 : vector<16x16xf32>
    %cst_26 = arith.constant dense<0.000000e+00> : vector<16xf32>
    %40 = vector.multi_reduction <add>, %39, %cst_26 [0] : vector<16x16xf32> to vector<16xf32>
    %41 = vector.shape_cast %40 : vector<16xf32> to vector<1x16xf32>
    %42 = tpu.reciprocal %41 {approx = true} : vector<1x16xf32> -> vector<1x16xf32>
    %43 = tpu.transpose %42, [1, 0] : vector<1x16xf32> -> vector<16x1xf32>
    %44 = arith.index_cast %23 : i32 to index
    %c0_27 = arith.constant 0 : index
    %45 = vector.load %arg5[%44, %c0_27] : memref<16x128xbf16, #tpu.memory_space<vmem>>, vector<16x128xbf16>
    %46 = arith.truncf %43 : vector<16x1xf32> to vector<16x1xbf16>
    %47 = vector.broadcast %46 : vector<16x1xbf16> to vector<16x128xbf16>
    %48 = arith.mulf %45, %47 : vector<16x128xbf16>
    %c0_28 = arith.constant 0 : index
    %c0_29 = arith.constant 0 : index
    %c0_30 = arith.constant 0 : index
    %49 = vector.load %arg4[%c0_28, %c0_29, %c0_30] : memref<1x16x128xf32, #tpu.memory_space<vmem>>, vector<1x16x128xf32>
    %50 = vector.shape_cast %49 : vector<1x16x128xf32> to vector<16x128xf32>
    %51 = arith.truncf %39 : vector<16x16xf32> to vector<16x16xbf16>
    %cst_31 = arith.constant dense<0.000000e+00> : vector<16x128xf32>
    %52 = tpu.matmul %51, %48, %cst_31 {dimension_numbers = #tpu.dot_dimension_numbers<[1], [0], [0], [1], [0, 0, 1, 1], [], []>} : vector<16x16xbf16>, vector<16x128xbf16>, vector<16x128xf32> -> vector<16x128xf32>
    %53 = arith.addf %50, %52 : vector<16x128xf32>
    %c0_32 = arith.constant 0 : index
    %c0_33 = arith.constant 0 : index
    %c0_34 = arith.constant 0 : index
    %54 = vector.load %arg4[%c0_32, %c0_33, %c0_34] : memref<1x16x128xf32, #tpu.memory_space<vmem>>, vector<1x16x128xf32>
    %55 = vector.shape_cast %54 : vector<1x16x128xf32> to vector<16x128xf32>
    %56 = vector.shape_cast %53 : vector<16x128xf32> to vector<1x16x128xf32>
    tpu.vector_store %arg4[%c0_32, %c0_33, %c0_34], %56 {strides = array<i32>} : memref<1x16x128xf32, #tpu.memory_space<vmem>>, vector<1x16x128xf32>,
    %c1_i32_35 = arith.constant 1 : i32
    %c0_36 = arith.constant 0 : index
    %c0_37 = arith.constant 0 : index
    %c0_38 = arith.constant 0 : index
    %57 = vector.load %arg4[%c0_36, %c0_37, %c0_38] : memref<1x16x128xf32, #tpu.memory_space<vmem>>, vector<1x16x128xf32>
    %58 = vector.shape_cast %57 : vector<1x16x128xf32> to vector<16x128xf32>
    %cst_39 = arith.constant 0.000000e+00 : f32
    %59 = vector.broadcast %cst_39 : f32 to vector<16x128xf32>
    %60 = arith.cmpf ogt, %58, %59 : vector<16x128xf32>
    %cst_40 = arith.constant 2.000000e-01 : f32
    %61 = vector.broadcast %cst_40 : f32 to vector<16x128xf32>
    %62 = arith.mulf %61, %58 : vector<16x128xf32>
    %63 = arith.select %60, %58, %62 : vector<16x128xi1>, vector<16x128xf32>
    %c0_41 = arith.constant 0 : index
    %c0_42 = arith.constant 0 : index
    %c0_43 = arith.constant 0 : index
    %64 = vector.load %arg4[%c0_41, %c0_42, %c0_43] : memref<1x16x128xf32, #tpu.memory_space<vmem>>, vector<1x16x128xf32>
    %65 = vector.shape_cast %64 : vector<1x16x128xf32> to vector<16x128xf32>
    %66 = vector.shape_cast %63 : vector<16x128xf32> to vector<1x16x128xf32>
    tpu.vector_store %arg4[%c0_41, %c0_42, %c0_43], %66 {strides = array<i32>} : memref<1x16x128xf32, #tpu.memory_space<vmem>>, vector<1x16x128xf32>,
    return
  }
  func.func @transform_0(%arg0: i32) -> (i32, i32, i32) {
    %c0_i32 = arith.constant 0 : i32
    %c0_i32_0 = arith.constant 0 : i32
    %c0_i32_1 = arith.constant 0 : i32
    return %arg0, %c0_i32, %c0_i32_0 : i32, i32, i32
  }
  func.func @transform_1(%arg0: i32) -> (i32, i32) {
    %c0_i32 = arith.constant 0 : i32
    %c0_i32_0 = arith.constant 0 : i32
    %c0_i32_1 = arith.constant 0 : i32
    return %c0_i32, %c0_i32_0 : i32, i32
  }
  func.func @transform_2(%arg0: i32) -> (i32, i32) {
    %c0_i32 = arith.constant 0 : i32
    %c0_i32_0 = arith.constant 0 : i32
    %c0_i32_1 = arith.constant 0 : i32
    return %c0_i32, %c0_i32_0 : i32, i32
  }
  func.func @transform_3(%arg0: i32) -> (i32, i32, i32) {
    %c0_i32 = arith.constant 0 : i32
    %c0_i32_0 = arith.constant 0 : i32
    %c0_i32_1 = arith.constant 0 : i32
    return %arg0, %c0_i32, %c0_i32_0 : i32, i32, i32
  }
}

</mosaic_0001>

<llo_original>
// kernel: tpu_custom_call.1
$region0: #{tpu_custom_call.1}
  #allocation0 [shape = 'u32[]', space=smem, size = 0x4, offset = 0x4, fixed_abs, tag = 'smem constant byte address 0x4 - core index']
  #allocation1 [shape = 'u32[72,128]{1,0:T(1,128)}', space=vmem, size = 0x9000, scoped, tag = 'internal scratch']
  #allocation2 [shape = 'bf16[16,128]{1,0:T(8,128)(2,1)}', space=vmem, size = 0x1000, scoped, tag = 'scratch operand']
  #allocation3 [shape = 'f32[16,1]{1,0:T(8,128)}', space=vmem, size = 0x2000, scoped, tag = 'scratch operand']
  #allocation4 [shape = 'f32[1,16]{1,0:T(1,128)}', space=vmem, size = 0x200, scoped, tag = 'scratch operand']
  %s0 = inlined_call_operand.hbm [shape: bf16[2,16,32], index: 0, kind: input, shape index: {}]
  %s1 = inlined_call_operand.hbm [shape: bf16[32,128], index: 1, kind: input, shape index: {}]
  %s2 = inlined_call_operand.hbm [shape: f32[2,128], index: 2, kind: input, shape index: {}]
  %s3 = inlined_call_operand.hbm [shape: f32[2,16,128], index: 3, kind: output, shape index: {}]
  %s4 = sld [smem:[#allocation0]]
  $region57: #{tpu_custom_call.1} parent=0
    _
  %s6 = ssub.s32 1, %s4
  %s7 = scalar_select 0, %s6, %s4
  $region1: #{tpu_custom_call.1} parent=0
    #allocation5 [shape = 'u8[8192]{0}', space=vmem, size = 0x2000, scoped, tag = 'input window, operand 0']
    #allocation6 [shape = 's32[2]{0}', space=sflag, size = 0x8, scoped, tag = 'scoped memory for tpu_custom_call.1']
    #allocation7 [shape = 's32[2]{0}', space=sflag, size = 0x8, scoped, tag = 'scoped memory for tpu_custom_call.1']
    #allocation8 [shape = 'u8[8192]{0}', space=vmem, size = 0x2000, scoped, tag = 'input window, operand 1, single buffered']
    #allocation9 [shape = 's32[1]{0}', space=sflag, size = 0x4, scoped, tag = 'scoped memory for tpu_custom_call.1']
    #allocation10 [shape = 'u8[1024]{0}', space=vmem, size = 0x400, scoped, tag = 'input window, operand 2, single buffered']
    #allocation11 [shape = 'u8[16384]{0}', space=vmem, size = 0x4000, scoped, tag = 'output window, operand 0']
    %8 = vsyncpa [#allocation6], 0
    %s9 = scalar_lea.sflag [#allocation6], 1
    %10 = vsyncpa %s9, 0
    %11 = vsyncpa [#allocation9], 0
    %12 = vsyncpa [#allocation7], 0
    %s13 = scalar_lea.sflag [#allocation7], 1
    %14 = vsyncpa %s13, 0
    loop: start=0, step=1, limit=4
    $region2: #{tpu_custom_call.1} parent=1 // loop_pre_header
      _
    $region3: #{tpu_custom_call.1} parent=1 // loop_header
      %s16 = sphi 0, %s20
      %p17 = scmp.ge.s32.totalorder %s16, 4
      %s26 = sphi 0, %s28
      %s29 = sphi 0, %s26
      %s30 = sphi 0, %s29
      %s46 = sphi 0, %s30
      %s50 = sphi 0, %s50
      %s52 = sphi 0, %s50
      %s53 = sphi 0, %s52
      %s67 = sphi 0, %s53
      %s71 = sphi 0, %s71
      %s73 = sphi 0, %s71
      %s74 = sphi 0, %s73
      %s88 = sphi 0, %s74
      %s94 = sphi 0, %s96
      %s97 = sphi 0, %s94
      %s98 = sphi 0, %s97
      %s114 = sphi 0, %s98
    $region4: #{tpu_custom_call.1} parent=1 // loop_header_branch
      %19 = sbr.rel (%p17) target = $region8
    $region5: #{tpu_custom_call.1} parent=1 // loop_body
      %s21 = ssub.s32 %s16, 1
      %s22 = ssub.s32 %s16, 2
      %s23 = sadd.s32 %s16, 1
      %s24 = ssub.s32 %s16, %s23
      %p25 = scmp.eq.s32.totalorder %s24, 0
      %s27 = sadd.s32 %s26, 1
      %s28 = scalar_select %p25, %s26, %s27
      %p31 = pneg %p25
      %p32 = scmp.eq.s32.totalorder %s16, 1
      %p33 = por %p31, %p32
      %p34 = scmp.ne.s32.totalorder %s26, %s29
      %p35 = scmp.eq.s32.totalorder %s16, 0
      %p36 = por %p34, %p35
      %p37 = scmp.ne.s32.totalorder %s26, %s29
      %p38 = scmp.eq.s32.totalorder %s21, 1
      %p39 = por %p37, %p38
      %p40 = scmp.ne.s32.totalorder %s29, %s30
      %p41 = scmp.eq.s32.totalorder %s21, 0
      %p42 = por %p40, %p41
      %p43 = scmp.ne.s32.totalorder %s29, %s30
      %p44 = scmp.eq.s32.totalorder %s22, 1
      %p45 = por %p43, %p44
      %p47 = scmp.ne.s32.totalorder %s30, %s46
      %p48 = scmp.eq.s32.totalorder %s22, 0
      %p49 = por %p47, %p48
      %s51 = sadd.s32 %s50, 1
      %p54 = scmp.eq.s32.totalorder %s16, 1
      %p55 = scmp.ne.s32.totalorder %s50, %s52
      %p56 = scmp.eq.s32.totalorder %s16, 0
      %p57 = por %p55, %p56
      %p58 = scmp.ne.s32.totalorder %s50, %s52
      %p59 = scmp.eq.s32.totalorder %s21, 1
      %p60 = por %p58, %p59
      %p61 = scmp.ne.s32.totalorder %s52, %s53
      %p62 = scmp.eq.s32.totalorder %s21, 0
      %p63 = por %p61, %p62
      %p64 = scmp.ne.s32.totalorder %s52, %s53
      %p65 = scmp.eq.s32.totalorder %s22, 1
      %p66 = por %p64, %p65
      %p68 = scmp.ne.s32.totalorder %s53, %s67
      %p69 = scmp.eq.s32.totalorder %s22, 0
      %p70 = por %p68, %p69
      %s72 = sadd.s32 %s71, 1
      %p75 = scmp.eq.s32.totalorder %s16, 1
      %p76 = scmp.ne.s32.totalorder %s71, %s73
      %p77 = scmp.eq.s32.totalorder %s16, 0
      %p78 = por %p76, %p77
      %p79 = scmp.ne.s32.totalorder %s71, %s73
      %p80 = scmp.eq.s32.totalorder %s21, 1
      %p81 = por %p79, %p80
      %p82 = scmp.ne.s32.totalorder %s73, %s74
      %p83 = scmp.eq.s32.totalorder %s21, 0
      %p84 = por %p82, %p83
      %p85 = scmp.ne.s32.totalorder %s73, %s74
      %p86 = scmp.eq.s32.totalorder %s22, 1
      %p87 = por %p85, %p86
      %p89 = scmp.ne.s32.totalorder %s74, %s88
      %p90 = scmp.eq.s32.totalorder %s22, 0
      %p91 = por %p89, %p90
      %s92 = ssub.s32 %s16, %s23
      %p93 = scmp.eq.s32.totalorder %s92, 0
      %s95 = sadd.s32 %s94, 1
      %s96 = scalar_select %p93, %s94, %s95
      %p99 = pneg %p93
      %p100 = scmp.eq.s32.totalorder %s16, 1
      %p101 = por %p99, %p100
      %p102 = scmp.ne.s32.totalorder %s94, %s97
      %p103 = scmp.eq.s32.totalorder %s16, 0
      %p104 = por %p102, %p103
      %p105 = scmp.ne.s32.totalorder %s94, %s97
      %p106 = scmp.eq.s32.totalorder %s21, 1
      %p107 = por %p105, %p106
      %p108 = scmp.ne.s32.totalorder %s97, %s98
      %p109 = scmp.eq.s32.totalorder %s21, 0
      %p110 = por %p108, %p109
      %p111 = scmp.ne.s32.totalorder %s97, %s98
      %p112 = scmp.eq.s32.totalorder %s22, 1
      %p113 = por %p111, %p112
      %p115 = scmp.ne.s32.totalorder %s98, %s114
      %p116 = scmp.eq.s32.totalorder %s22, 0
      %p117 = por %p115, %p116
      %p118 = scmp.le.s32.totalorder 1, %s16
      %p119 = scmp.lt.s32.totalorder %s16, 3
      %p120 = pnand %p118, %p119
      %p121 = pneg %p120
      // Predicated region
      $region9: #{tpu_custom_call.1} parent=5 // pred_check
        _
      $region10: #{tpu_custom_call.1} parent=5 // pred_check_branch
        %123 = sbr.rel (%p120) target = $region12
      $region11: #{tpu_custom_call.1} parent=5 // pred_region
        %s124 = ssub.s32 %s16, 1
        // Predicated region
        $region13: #{tpu_custom_call.1} parent=11 // pred_check
          %p125 = pneg %p63
        $region14: #{tpu_custom_call.1} parent=11 // pred_check_branch
          %127 = sbr.rel (%p125) target = $region16
        $region15: #{tpu_custom_call.1} parent=11 // pred_region
          %129 = vsyncadd [#allocation9], 0
          %s130 = sshll.u32 %s1, 4
          %s131 = int_to_ptr.hbm [resolvable:$true] %s130
          %s132 = sshll.u32 [#allocation8], 4
          %s133 = int_to_ptr.vmem [resolvable:$true] %s132
          %138 = dma.hbm_to_vmem [thread:$0]  %s131, 256, %s133, [#allocation9], 64, 64, 4
        $region16: #{tpu_custom_call.1} parent=11 // pred_fallthru
          _
        // Predicated region
        $region17: #{tpu_custom_call.1} parent=11 // pred_check
          %p139 = pneg %p84
        $region18: #{tpu_custom_call.1} parent=11 // pred_check_branch
          %141 = sbr.rel (%p139) target = $region20
        $region19: #{tpu_custom_call.1} parent=11 // pred_region
          %143 = vsyncadd [#allocation9], 0
          %s145 = sshll.u32 %s2, 4
          %s146 = int_to_ptr.hbm [resolvable:$true] %s145
          %s147 = sshll.u32 [#allocation10], 4
          %s148 = int_to_ptr.vmem [resolvable:$true] %s147
          %150 = dma.hbm_to_vmem [thread:$0]  %s146, 32, %s148, [#allocation9]
        $region20: #{tpu_custom_call.1} parent=11 // pred_fallthru
          _
      $region12: #{tpu_custom_call.1} parent=5 // pred_fallthru
        _
      %p151 = scmp.lt.s32.totalorder %s16, 2
      // Predicated region
      $region21: #{tpu_custom_call.1} parent=5 // pred_check
        %p152 = pneg %p151
      $region22: #{tpu_custom_call.1} parent=5 // pred_check_branch
        %154 = sbr.rel (%p152) target = $region24
      $region23: #{tpu_custom_call.1} parent=5 // pred_region
        // Predicated region
        $region25: #{tpu_custom_call.1} parent=23 // pred_check
          %p155 = pneg %p36
        $region26: #{tpu_custom_call.1} parent=23 // pred_check_branch
          %157 = sbr.rel (%p155) target = $region28
        $region27: #{tpu_custom_call.1} parent=23 // pred_region
          %s158 = sand.u32 %s26, 1
          %s159 = scalar_lea.sflag [#allocation6], %s158
          %s160 = sand.u32 %s26, 1
          %s161 = smul.addr %s160, 8
          %s162 = scalar_lea.vmem [#allocation5], %s161
          %164 = vsyncadd %s159, 0
          %s165 = smul.addr %s16, 2
          %s166 = smul.addr %s165, 4
          %s167 = scalar_lea.hbm %s0, %s166
          %s168 = sshll.u32 %s167, 4
          %s169 = int_to_ptr.hbm [resolvable:$true] %s168
          %s170 = sshll.u32 %s162, 4
          %s171 = int_to_ptr.vmem [resolvable:$true] %s170
          %176 = dma.hbm_to_vmem [thread:$0]  %s169, 128, %s171, %s159, 64, 64, 4
        $region28: #{tpu_custom_call.1} parent=23 // pred_fallthru
          _
      $region24: #{tpu_custom_call.1} parent=5 // pred_fallthru
        _
      %p177 = scmp.le.s32.totalorder 1, %s16
      %p178 = scmp.lt.s32.totalorder %s16, 3
      %p179 = pnand %p177, %p178
      %p180 = pneg %p179
      // Predicated region
      $region29: #{tpu_custom_call.1} parent=5 // pred_check
        _
      $region30: #{tpu_custom_call.1} parent=5 // pred_check_branch
        %182 = sbr.rel (%p179) target = $region32
      $region31: #{tpu_custom_call.1} parent=5 // pred_region
        %s183 = ssub.s32 %s16, 1
        %s184 = sand.u32 %s29, 1
        %s185 = scalar_lea.sflag [#allocation6], %s184
        %s186 = sand.u32 %s29, 1
        %s187 = smul.addr %s186, 8
        %s188 = scalar_lea.vmem [#allocation5], %s187
        // Predicated region
        $region33: #{tpu_custom_call.1} parent=31 // pred_check
          %p189 = pneg %p42
        $region34: #{tpu_custom_call.1} parent=31 // pred_check_branch
          %191 = sbr.rel (%p189) target = $region36
        $region35: #{tpu_custom_call.1} parent=31 // pred_region
          %193 = dma.done %s185, 128
        $region36: #{tpu_custom_call.1} parent=31 // pred_fallthru
          _
        // Predicated region
        $region37: #{tpu_custom_call.1} parent=31 // pred_check
          %p194 = pneg %p63
        $region38: #{tpu_custom_call.1} parent=31 // pred_check_branch
          %196 = sbr.rel (%p194) target = $region40
        $region39: #{tpu_custom_call.1} parent=31 // pred_region
          %198 = dma.done [#allocation9], 256
        $region40: #{tpu_custom_call.1} parent=31 // pred_fallthru
          _
        // Predicated region
        $region41: #{tpu_custom_call.1} parent=31 // pred_check
          %p199 = pneg %p84
        $region42: #{tpu_custom_call.1} parent=31 // pred_check_branch
          %201 = sbr.rel (%p199) target = $region44
        $region43: #{tpu_custom_call.1} parent=31 // pred_region
          %203 = dma.done [#allocation9], 32
        $region44: #{tpu_custom_call.1} parent=31 // pred_fallthru
          _
        %s204 = sand.u32 %s29, 1
        %s205 = scalar_lea.sflag [#allocation6], %s204
        %s206 = sand.u32 %s29, 1
        %s207 = smul.addr %s206, 8
        %s208 = scalar_lea.vmem [#allocation5], %s207
        %p209 = pneg %p42
        %p210 = pneg %p39
        %p211 = pneg %p63
        %p212 = pneg %p60
        %p213 = pneg %p84
        %p214 = pneg %p81
        %p215 = pneg %p110
        %p216 = pneg %p107
        %s217 = sand.u32 %s97, 1
        %s218 = scalar_lea.sflag [#allocation7], %s217
        %s219 = sand.u32 %s97, 1
        %s220 = smul.addr %s219, 16
        %s221 = scalar_lea.vmem [#allocation11], %s220
        %v223 = vld [vmem:[%s188] sm:$0xf]
        %v224 = vld [vmem:[%s188 + $0x4] sm:$0xf]
        %v225 = vld [vmem:[#allocation8] sm:$0xf]
        %v226 = vld [vmem:[#allocation8 + $0x4] sm:$0xf]
        %v227 = vld [vmem:[#allocation8 + $0x8] sm:$0xf]
        %v228 = vld [vmem:[#allocation8 + $0xc] sm:$0xf]
        %v231 = vunpack.c.l.b16 %v223
        %v232 = vunpack.c.l.b16 %v224
        %v233 = vpack.c.b16 %v232, %v231
        %v238 = vunpack.c.l.b16 %v225
        %v239 = vunpack.c.l.b16 %v226
        %v240 = vunpack.c.l.b16 %v227
        %v241 = vunpack.c.l.b16 %v228
        %v242 = vpack.c.b16 %v239, %v238
        %v243 = vpack.c.b16 %v241, %v240
        %vm246 = vcmask 261120
        %v248 = vsel %vm246, %v233, 0
        %250 = vmatpush.bf16.msra.mxu0 0
        %251 = vmatpush.bf16.msra.mxu0 0
        %252 = vmatpush.bf16.msra.mxu0 0
        %253 = vmatpush.bf16.msra.mxu0 0
        %254 = vmatpush.bf16.msra.mxu0 0
        %255 = vmatpush.bf16.msra.mxu0 0
        %256 = vmatpush.bf16.msra.mxu0 %v243
        %257 = vmatpush.bf16.msra.mxu0 %v242
        %258 = vmatmul.bf16.gmra.mxu0 %v248
        %v259 = vpop.f32.mrf.mxu0
        %v260 = vadd.f32 0.0, %v259
        %v261 = vpop.f32.mrf.mxu0
        %v262 = vadd.f32 0.0, %v261
        %263 = vdwg.mxu0
        %v264 = vld [vmem:[#allocation10] sm:$0x1]
        %v265 = vperm.slane %v264, 0
        %v266 = vmul.f32 %v260, %v265
        %v267 = vmul.f32 %v262, %v265
        %268 = vadd.xlane.f32.xlu0 %v266
        %v269 = vpop.xlane.xlu0 %268
        %270 = vadd.xlane.f32.xlu0 %v267
        %v271 = vpop.xlane.xlu0 %270
        %vm272 = vcmask 7168
        %273 = vst.msk [vmem:[#allocation3] sm:$0xff] %vm272, %v269
        %274 = vst.msk [vmem:[#allocation3 + $0x8] sm:$0xff] %vm272, %v271
        %v275 = vld [vmem:[#allocation10 + $0x1] sm:$0x1]
        %v276 = vperm.slane %v275, 0
        %v277 = vmul.f32 %v260, %v276
        %v278 = vmul.f32 %v262, %v276
        %279 = vadd.xlane.f32.xlu0 %v277
        %v280 = vpop.xlane.xlu0 %279
        %281 = vadd.xlane.f32.xlu0 %v278
        %v282 = vpop.xlane.xlu0 %281
        %283 = vxpose.xlu0.b32.start [1/16] %v280, 128
        %284 = vxpose.xlu0.b32.cont [2/16] %v282, 128
        %285 = vxpose.xlu0.b32.cont [3/16] 0.0, 128
        %286 = vxpose.xlu0.b32.cont [4/16] 0.0, 128
        %287 = vxpose.xlu0.b32.cont [5/16] 0.0, 128
        %288 = vxpose.xlu0.b32.cont [6/16] 0.0, 128
        %289 = vxpose.xlu0.b32.cont [7/16] 0.0, 128
        %290 = vxpose.xlu0.b32.cont [8/16] 0.0, 128
        %291 = vxpose.xlu0.b32.cont [9/16] 0.0, 128
        %292 = vxpose.xlu0.b32.cont [10/16] 0.0, 128
        %293 = vxpose.xlu0.b32.cont [11/16] 0.0, 128
        %294 = vxpose.xlu0.b32.cont [12/16] 0.0, 128
        %295 = vxpose.xlu0.b32.cont [13/16] 0.0, 128
        %296 = vxpose.xlu0.b32.cont [14/16] 0.0, 128
        %297 = vxpose.xlu0.b32.cont [15/16] 0.0, 128
        %298 = vxpose.xlu0.b32.end [16/16] 0.0, 128
        %v299 = vpop.trf.xlu0
        %v300 = vpop.trf.xlu0
        %v301 = vpop.trf.xlu0
        %v302 = vpop.trf.xlu0
        %v303 = vpop.trf.xlu0
        %v304 = vpop.trf.xlu0
        %v305 = vpop.trf.xlu0
        %v306 = vpop.trf.xlu0
        %v307 = vpop.trf.xlu0
        %v308 = vpop.trf.xlu0
        %v309 = vpop.trf.xlu0
        %v310 = vpop.trf.xlu0
        %v311 = vpop.trf.xlu0
        %v312 = vpop.trf.xlu0
        %v313 = vpop.trf.xlu0
        %v314 = vpop.trf.xlu0
        %vm315 = vcmask 122880
        %316 = vst.msk [vmem:[#allocation4] sm:$0x1] %vm315, %v299
        %v317 = vpack.c.bf16 %v260, %v260
        %v318 = vpack.c.bf16 %v262, %v262
        %319 = vst [vmem:[#allocation2] sm:$0xf] %v317
        %320 = vst [vmem:[#allocation2 + $0x4] sm:$0xf] %v318
        %321 = vst [vmem:[%s221] sm:$0xff] 0.0
        %322 = vst [vmem:[%s221 + $0x8] sm:$0xff] 0.0
        %v323 = vld [vmem:[#allocation3] sm:$0xff]
        %v324 = vld [vmem:[#allocation3 + $0x8] sm:$0xff]
        %v325 = vld [vmem:[#allocation4] sm:$0x1]
        %327 = vset.pattern.permute.xlu0 0
        %328 = vperm.xlu0 %327, %v323
        %v329 = vpop.permute.xlu0 %328
        %332 = vset.pattern.permute.xlu0 0
        %333 = vperm.xlu0 %332, %v324
        %v334 = vpop.permute.xlu0 %333
        %v337 = vperm.slane %v325, 0
        %v339 = vadd.f32 %v329, %v337
        %v340 = vadd.f32 %v334, %v337
        %vm341 = vcmp.gt.f32.partialorder %v339, 0.0
        %vm342 = vcmp.gt.f32.partialorder %v340, 0.0
        %v343 = vmul.f32 %v339, 0.2
        %v344 = vmul.f32 %v340, 0.2
        %v345 = vsel %vm341, %v339, %v343
        %v346 = vsel %vm342, %v340, %v344
        %vm347 = vcmask 130048
        %v348 = vsel %vm347, %v345, -inf
        %v349 = vsel %vm347, %v346, -inf
        %v350 = vmax.f32 %v348, %v349
        %v351 = vrot.slane %v350, 4
        %v352 = vmax.f32 %v350, %v351
        %v353 = vrot.slane %v352, 2
        %v354 = vmax.f32 %v352, %v353
        %v355 = vrot.slane %v354, 1
        %v356 = vmax.f32 %v354, %v355
        %v357 = vsub.f32 %v345, %v356
        %v358 = vsub.f32 %v346, %v356
        %v359 = vmul.f32 %v357, 1.442695
        %v360 = vpow.pop %v359
        %v361 = vmul.f32 %v358, 1.442695
        %v362 = vpow.pop %v361
        %v363 = vsel %vm347, %v360, 0.0
        %v364 = vsel %vm347, %v362, 0.0
        %v365 = vadd.f32 %v363, %v364
        %v366 = vrot.slane %v365, 4
        %v367 = vadd.f32 %v365, %v366
        %v368 = vrot.slane %v367, 2
        %v369 = vadd.f32 %v367, %v368
        %v370 = vrot.slane %v369, 1
        %v371 = vadd.f32 %v369, %v370
        %v372 = vrcp.pop %v371
        %373 = vxpose.xlu0.b32.start [1/16] %v372, 128
        %374 = vxpose.xlu0.b32.cont [2/16] 0.0, 128
        %375 = vxpose.xlu0.b32.cont [3/16] 0.0, 128
        %376 = vxpose.xlu0.b32.cont [4/16] 0.0, 128
        %377 = vxpose.xlu0.b32.cont [5/16] 0.0, 128
        %378 = vxpose.xlu0.b32.cont [6/16] 0.0, 128
        %379 = vxpose.xlu0.b32.cont [7/16] 0.0, 128
        %380 = vxpose.xlu0.b32.cont [8/16] 0.0, 128
        %381 = vxpose.xlu0.b32.cont [9/16] 0.0, 128
        %382 = vxpose.xlu0.b32.cont [10/16] 0.0, 128
        %383 = vxpose.xlu0.b32.cont [11/16] 0.0, 128
        %384 = vxpose.xlu0.b32.cont [12/16] 0.0, 128
        %385 = vxpose.xlu0.b32.cont [13/16] 0.0, 128
        %386 = vxpose.xlu0.b32.cont [14/16] 0.0, 128
        %387 = vxpose.xlu0.b32.cont [15/16] 0.0, 128
        %388 = vxpose.xlu0.b32.end [16/16] 0.0, 128
        %v389 = vpop.trf.xlu0
        %v390 = vpop.trf.xlu0
        %v391 = vpop.trf.xlu0
        %v392 = vpop.trf.xlu0
        %v393 = vpop.trf.xlu0
        %v394 = vpop.trf.xlu0
        %v395 = vpop.trf.xlu0
        %v396 = vpop.trf.xlu0
        %v397 = vpop.trf.xlu0
        %v398 = vpop.trf.xlu0
        %v399 = vpop.trf.xlu0
        %v400 = vpop.trf.xlu0
        %v401 = vpop.trf.xlu0
        %v402 = vpop.trf.xlu0
        %v403 = vpop.trf.xlu0
        %v404 = vpop.trf.xlu0
        %v405 = vld [vmem:[#allocation2] sm:$0xf]
        %v406 = vld [vmem:[#allocation2 + $0x4] sm:$0xf]
        %v407 = vpack.c.bf16 %v389, %v389
        %v408 = vpack.c.bf16 %v390, %v390
        %410 = vset.pattern.permute.xlu0 0
        %411 = vperm.xlu0 %410, %v407
        %v412 = vpop.permute.xlu0 %411
        %v415 = vunpack.c.l.s4 839922192
        %v416 = vunpack.c.0.s8 %v415
        %v417 = vperm.slane %v412, %v416
        %419 = vset.pattern.permute.xlu0 0
        %420 = vperm.xlu0 %419, %v408
        %v421 = vpop.permute.xlu0 %420
        %v424 = vunpack.c.l.s4 839922192
        %v425 = vunpack.c.0.s8 %v424
        %v426 = vperm.slane %v421, %v425
        %v427 = vunpack.c.l.bf16 %v405
        %v428 = vunpack.c.l.bf16 %v406
        %v429 = vunpack.c.l.bf16 %v417
        %v430 = vunpack.c.l.bf16 %v426
        %v431 = vmul.f32 %v427, %v429
        %v432 = vmul.f32 %v428, %v430
        %v433 = vpack.c.bf16 %v432, %v431
        %v434 = vld [vmem:[%s221] sm:$0xff]
        %v435 = vld [vmem:[%s221 + $0x8] sm:$0xff]
        %v436 = vpack.c.bf16 %v362, %v360
        %v438 = vsel %vm347, %v436, 0
        %440 = vmatpush.bf16.msra.mxu0 0
        %441 = vmatpush.bf16.msra.mxu0 0
        %442 = vmatpush.bf16.msra.mxu0 0
        %443 = vmatpush.bf16.msra.mxu0 0
        %444 = vmatpush.bf16.msra.mxu0 0
        %445 = vmatpush.bf16.msra.mxu0 0
        %446 = vmatpush.bf16.msra.mxu0 0
        %447 = vmatpush.bf16.msra.mxu0 %v433
        %448 = vmatmul.bf16.gmra.mxu0 %v438
        %v449 = vpop.f32.mrf.mxu0
        %v450 = vadd.f32 0.0, %v449
        %v451 = vpop.f32.mrf.mxu0
        %v452 = vadd.f32 0.0, %v451
        %453 = vdwg.mxu0
        %v454 = vadd.f32 %v434, %v450
        %v455 = vadd.f32 %v435, %v452
        %456 = vst [vmem:[%s221] sm:$0xff] %v454
        %457 = vst [vmem:[%s221 + $0x8] sm:$0xff] %v455
        %v458 = vld [vmem:[%s221] sm:$0xff]
        %v459 = vld [vmem:[%s221 + $0x8] sm:$0xff]
        %vm460 = vcmp.gt.f32.partialorder %v458, 0.0
        %vm461 = vcmp.gt.f32.partialorder %v459, 0.0
        %v462 = vmul.f32 %v458, 0.2
        %v463 = vmul.f32 %v459, 0.2
        %v464 = vsel %vm460, %v458, %v462
        %v465 = vsel %vm461, %v459, %v463
        %466 = vst [vmem:[%s221] sm:$0xff] %v464
        %467 = vst [vmem:[%s221 + $0x8] sm:$0xff] %v465
        %s468 = sand.u32 %s97, 1
        %s469 = scalar_lea.sflag [#allocation7], %s468
        %s470 = sand.u32 %s97, 1
        %s471 = smul.addr %s470, 16
        %s472 = scalar_lea.vmem [#allocation11], %s471
        // Predicated region
        $region45: #{tpu_custom_call.1} parent=31 // pred_check
          %p473 = pneg %p107
        $region46: #{tpu_custom_call.1} parent=31 // pred_check_branch
          %475 = sbr.rel (%p473) target = $region48
        $region47: #{tpu_custom_call.1} parent=31 // pred_region
          %477 = vsyncadd %s469, 0
          %s478 = smul.addr %s21, 2
          %s479 = smul.addr %s478, 8
          %s480 = scalar_lea.hbm %s3, %s479
          %s481 = sshll.u32 %s472, 4
          %s482 = int_to_ptr.vmem [resolvable:$true] %s481
          %s483 = sshll.u32 %s480, 4
          %s484 = int_to_ptr.hbm [resolvable:$true] %s483
          %489 = dma.vmem_to_hbm [thread:$0]  %s482, 256, %s484, %s469, 128, 128, 8
        $region48: #{tpu_custom_call.1} parent=31 // pred_fallthru
          _
      $region32: #{tpu_custom_call.1} parent=5 // pred_fallthru
        _
      %p490 = scmp.le.s32.totalorder 2, %s16
      // Predicated region
      $region49: #{tpu_custom_call.1} parent=5 // pred_check
        %p491 = pneg %p490
      $region50: #{tpu_custom_call.1} parent=5 // pred_check_branch
        %493 = sbr.rel (%p491) target = $region52
      $region51: #{tpu_custom_call.1} parent=5 // pred_region
        %s494 = ssub.s32 %s16, 2
        // Predicated region
        $region53: #{tpu_custom_call.1} parent=51 // pred_check
          %p495 = pneg %p113
        $region54: #{tpu_custom_call.1} parent=51 // pred_check_branch
          %497 = sbr.rel (%p495) target = $region56
        $region55: #{tpu_custom_call.1} parent=51 // pred_region
          %s498 = sand.u32 %s98, 1
          %s499 = scalar_lea.sflag [#allocation7], %s498
          %s500 = sand.u32 %s98, 1
          %s501 = smul.addr %s500, 16
          %s502 = scalar_lea.vmem [#allocation11], %s501
          %504 = dma.done %s499, 256
        $region56: #{tpu_custom_call.1} parent=51 // pred_fallthru
          _
      $region52: #{tpu_custom_call.1} parent=5 // pred_fallthru
        _
    $region6: #{tpu_custom_call.1} parent=1 // loop_footer
      %s20 = sadd.s32 1, %s16
    $region7: #{tpu_custom_call.1} parent=1 // loop_footer_branch
      %15 = sbr.rel target = $region3
    $region8: #{tpu_custom_call.1} parent=1 // loop_exit
      _
    %505 = vsyncpa [#allocation6], 1
    %s506 = scalar_lea.sflag [#allocation6], 1
    %507 = vsyncpa %s506, 1
    %508 = vsyncpa [#allocation9], 1
    %509 = vsyncpa [#allocation7], 1
    %s510 = scalar_lea.sflag [#allocation7], 1
    %511 = vsyncpa %s510, 1

</llo_original>
